<compile_context>
chip_gen: v7x
topology: tpu7x:2x2x1
jax: 0.10.0
libtpu: 0.0.40
codegen_flags: <defaults>
</compile_context>

<pallas_src>
import functools

import jax
import jax.numpy as jnp
from jax.experimental import pallas as pl
from jax.experimental.pallas import tpu as pltpu

NEG_BIG = -1e30  # pad-class bias (f32): exp underflows to exactly 0


def _round_up(x, m):
    return ((x + m - 1) // m) * m


def _mlp_logsoftmax_kernel(x_ref, w1_ref, b1_ref, w2_ref, b2_ref,
                           w3_ref, b3_ref, o_ref):
    # x arrives in its original dtype (no wrapper-side cast/pad HBM roundtrip);
    # cast to bf16 on-chip for the MXU.  Biases / elementwise math stay f32.
    x = x_ref[...].astype(jnp.bfloat16)

    # fc1 + relu (bf16 MXU operands, f32 accumulation)
    h1 = jnp.dot(x, w1_ref[...], preferred_element_type=jnp.float32) + b1_ref[...]
    h1 = jnp.maximum(h1, 0.0)

    # fc2 + relu
    h2 = jnp.dot(h1.astype(jnp.bfloat16), w2_ref[...],
                 preferred_element_type=jnp.float32) + b2_ref[...]
    h2 = jnp.maximum(h2, 0.0)

    # fc3 (class dim lane-padded; pad cols: zero weights + -1e30 f32 bias)
    logits = jnp.dot(h2.astype(jnp.bfloat16), w3_ref[...],
                     preferred_element_type=jnp.float32) + b3_ref[...]

    # log_softmax over the class axis (dim=1), numerically stable, all f32.
    m = jnp.max(logits, axis=1, keepdims=True)
    z = logits - m
    lse = jnp.log(jnp.sum(jnp.exp(z), axis=1, keepdims=True))
    o_ref[...] = (z - lse).astype(o_ref.dtype)


def prepare_params(params):
    """One-time weight prep (hoisted out of the per-call path):
    pad w3/b3 to a lane-dense class dim and cast MXU operands to bf16.
    w_i are (in, out) (transpose of PyTorch layout); b_i are (out,) or (1, out)."""
    w1, b1, w2, b2, w3, b3 = params
    nb_classes = w3.shape[1]
    n_pad = _round_up(nb_classes, 128)
    h2_dim = w3.shape[0]

    w3p = jnp.zeros((h2_dim, n_pad), jnp.bfloat16).at[:, :nb_classes].set(
        w3.astype(jnp.bfloat16))
    # Keep the pad bias in f32: the -1e30 trick relies on f32 range.
    b3p = jnp.full((1, n_pad), NEG_BIG, jnp.float32).at[:, :nb_classes].set(
        b3.reshape(1, -1).astype(jnp.float32))

    return (w1.astype(jnp.bfloat16), b1.reshape(1, -1).astype(jnp.float32),
            w2.astype(jnp.bfloat16), b2.reshape(1, -1).astype(jnp.float32),
            w3p, b3p)


@functools.partial(
    jax.jit,
    static_argnames=("nb_classes", "tile_b", "out_dtype", "trim_output"))
def linear_classifier_forward(x, prepared, *, nb_classes, tile_b=4096,
                              out_dtype=jnp.float32, trim_output=True):
    """x: (batch, ft_in). prepared: output of prepare_params()."""
    w1, b1, w2, b2, w3p, b3p = prepared
    batch, ft_in = x.shape
    h1_dim = w1.shape[1]
    h2_dim = w2.shape[1]
    n_pad = w3p.shape[1]

    x_isz = jnp.dtype(x.dtype).itemsize
    out_isz = jnp.dtype(out_dtype).itemsize

    # --- batch tiling --------------------------------------------------------
    # Multiple of 16 sublanes (covers bf16 packing for the bf16-output case).
    tile_b = max(16, min(tile_b, _round_up(batch, 16)))

    # VMEM budget: 2x (double-buffered) x and out tiles + 2x weights must fit
    # comfortably under v7x's 64 MiB physical VMEM.
    weight_bytes = ((ft_in * h1_dim + h1_dim * h2_dim + h2_dim * n_pad) * 2
                    + (h1_dim + h2_dim + n_pad) * 4)
    vmem_budget = 40 * 1024 * 1024
    per_row = 2 * (ft_in * x_isz + n_pad * out_isz)
    max_rows = max(16, (vmem_budget - 2 * weight_bytes) // per_row)
    tile_b = min(tile_b, (max_rows // 16) * 16)

    # Keep >=2 grid steps when the batch allows it, so the "parallel" batch
    # axis can shard across both TensorCores on v7x (one step idles a core).
    if batch > 16 and tile_b >= batch:
        tile_b = max(16, _round_up(pl.cdiv(batch, 2), 16))
    # Tiny batch: a single full-batch block is always a legal block shape.
    if tile_b >= batch:
        tile_b = batch

    num_tiles = pl.cdiv(batch, tile_b)  # ragged tail handled by Pallas masking

    # Explicit VMEM limit (v5e's scoped default is only 16 MiB).
    vmem_limit = int(min(
        2 * tile_b * (ft_in * x_isz + n_pad * out_isz)
        + 2 * weight_bytes + (16 << 20),
        60 * 1024 * 1024))

    cost = pl.CostEstimate(
        flops=2 * batch * (ft_in * h1_dim + h1_dim * h2_dim + h2_dim * n_pad),
        transcendentals=batch * n_pad,
        bytes_accessed=(batch * ft_in * x_isz + batch * n_pad * out_isz
                        + weight_bytes),
    )

    out = pl.pallas_call(
        _mlp_logsoftmax_kernel,
        out_shape=jax.ShapeDtypeStruct((batch, n_pad), out_dtype),
        grid=(num_tiles,),
        in_specs=[
            # per-step batch tile of activations (double-buffered pipeline)
            pl.BlockSpec((tile_b, ft_in), lambda i: (i, 0)),
            # weights & biases: whole-array blocks, constant index_map ->
            # loaded once and resident in VMEM across all grid steps
            pl.BlockSpec((ft_in, h1_dim), lambda i: (0, 0)),
            pl.BlockSpec((1, h1_dim), lambda i: (0, 0)),
            pl.BlockSpec((h1_dim, h2_dim), lambda i: (0, 0)),
            pl.BlockSpec((1, h2_dim), lambda i: (0, 0)),
            pl.BlockSpec((h2_dim, n_pad), lambda i: (0, 0)),
            pl.BlockSpec((1, n_pad), lambda i: (0, 0)),
        ],
        out_specs=pl.BlockSpec((tile_b, n_pad), lambda i: (i, 0)),
        compiler_params=pltpu.CompilerParams(
            dimension_semantics=("parallel",),
            vmem_limit_bytes=vmem_limit),
        cost_estimate=cost,
    )(x, w1, b1, w2, b2, w3p, b3p)

    if trim_output:
        # Matches the module's (batch, nb_classes) output.  A fused consumer
        # (argmax / NLL gather) should pass trim_output=False and use the
        # lane-dense slab directly to avoid an extra HBM roundtrip.
        return out[:, :nb_classes]
    return out


def init_params(key, ft_in, nb_classes):
    """Deterministic synthetic init mimicking nn.Linear shapes.
    PyTorch stores weight as (out, in); we store the transpose (in, out)."""
    ks = jax.random.split(key, 6)

    def lin(kw, kb, fan_in, fan_out):
        bound = 1.0 / jnp.sqrt(float(fan_in))
        w = jax.random.uniform(kw, (fan_in, fan_out), jnp.float32, -bound, bound)
        b = jax.random.uniform(kb, (1, fan_out), jnp.float32, -bound, bound)
        return w, b

    w1, b1 = lin(ks[0], ks[1], ft_in, 32)
    w2, b2 = lin(ks[2], ks[3], 32, 16)
    w3, b3 = lin(ks[4], ks[5], 16, nb_classes)
    return (w1, b1, w2, b2, w3, b3)


def _reference_forward(x, params):
    """Pure-JAX f32 reference (matches the PyTorch module)."""
    w1, b1, w2, b2, w3, b3 = params
    h1 = jnp.maximum(x @ w1 + b1, 0.0)
    h2 = jnp.maximum(h1 @ w2 + b2, 0.0)
    logits = h2 @ w3 + b3
    return jax.nn.log_softmax(logits, axis=1)


if __name__ == "__main__":
    ft_in = 32
    nb_classes = 10
    batch = 40  # not a multiple of the tile -> exercises the ragged last block

    key = jax.random.PRNGKey(0)
    k_x, k_p = jax.random.split(key)
    x = jax.random.normal(k_x, (batch, ft_in), jnp.float32)
    params = init_params(k_p, ft_in, nb_classes)

    prepared = prepare_params(params)   # one-time weight prep (outside jit path)

    out = linear_classifier_forward(x, prepared, nb_classes=nb_classes)
    out = jax.block_until_ready(out)

    # sanity 1: shape and log_softmax normalization (rows sum to 1 in prob space)
    assert out.shape == (batch, nb_classes), out.shape
    row_sums = jnp.sum(jnp.exp(out.astype(jnp.float32)), axis=1)
    assert bool(jnp.allclose(row_sums, 1.0, atol=1e-3)), row_sums

    # sanity 2: matches f32 reference within bf16-MXU tolerance
    ref = _reference_forward(x, params)
    assert bool(jnp.allclose(out.astype(jnp.float32), ref, atol=0.1, rtol=0.1))

    print("KERNEL_OK")
</pallas_src>

<mosaic_0001>
module attributes {stable_mosaic.version = 11 : i64} {
  func.func @_mlp_logsoftmax_kernel(%arg0: i32, %arg1: memref<32x32xf32, #tpu.memory_space<vmem>>, %arg2: memref<32x32xbf16, #tpu.memory_space<vmem>>, %arg3: memref<1x32xf32, #tpu.memory_space<vmem>>, %arg4: memref<32x16xbf16, #tpu.memory_space<vmem>>, %arg5: memref<1x16xf32, #tpu.memory_space<vmem>>, %arg6: memref<16x128xbf16, #tpu.memory_space<vmem>>, %arg7: memref<1x128xf32, #tpu.memory_space<vmem>>, %arg8: memref<32x128xf32, #tpu.memory_space<vmem>>) attributes {dimension_semantics = [#tpu.dimension_semantics<parallel>], iteration_bounds = array<i64: 2>, scalar_prefetch = 0 : i64, scratch_operands = 0 : i64, tpu.core_type = #tpu.core_type<tc>, window_params = [{transform_indices = @transform_0, window_bounds = array<i64: 32, 32>}, {pipeline_mode = #tpu.pipeline_mode<synchronous>, transform_indices = @transform_1, window_bounds = array<i64: 32, 32>}, {pipeline_mode = #tpu.pipeline_mode<synchronous>, transform_indices = @transform_2, window_bounds = array<i64: 1, 32>}, {pipeline_mode = #tpu.pipeline_mode<synchronous>, transform_indices = @transform_3, window_bounds = array<i64: 32, 16>}, {pipeline_mode = #tpu.pipeline_mode<synchronous>, transform_indices = @transform_4, window_bounds = array<i64: 1, 16>}, {pipeline_mode = #tpu.pipeline_mode<synchronous>, transform_indices = @transform_5, window_bounds = array<i64: 16, 128>}, {pipeline_mode = #tpu.pipeline_mode<synchronous>, transform_indices = @transform_6, window_bounds = array<i64: 1, 128>}, {transform_indices = @transform_7, window_bounds = array<i64: 32, 128>}]} {
    %c0 = arith.constant 0 : index
    %c0_0 = arith.constant 0 : index
    %0 = vector.load %arg1[%c0, %c0_0] : memref<32x32xf32, #tpu.memory_space<vmem>>, vector<32x32xf32>
    %1 = arith.truncf %0 : vector<32x32xf32> to vector<32x32xbf16>
    %c0_1 = arith.constant 0 : index
    %c0_2 = arith.constant 0 : index
    %2 = vector.load %arg2[%c0_1, %c0_2] : memref<32x32xbf16, #tpu.memory_space<vmem>>, vector<32x32xbf16>
    %cst = arith.constant dense<0.000000e+00> : vector<32x32xf32>
    %3 = tpu.matmul %1, %2, %cst {dimension_numbers = #tpu.dot_dimension_numbers<[1], [0], [0], [1], [0, 0, 1, 1], [], []>} : vector<32x32xbf16>, vector<32x32xbf16>, vector<32x32xf32> -> vector<32x32xf32>
    %c0_3 = arith.constant 0 : index
    %c0_4 = arith.constant 0 : index
    %4 = vector.load %arg3[%c0_3, %c0_4] : memref<1x32xf32, #tpu.memory_space<vmem>>, vector<1x32xf32>
    %5 = vector.broadcast %4 : vector<1x32xf32> to vector<32x32xf32>
    %6 = arith.addf %3, %5 : vector<32x32xf32>
    %cst_5 = arith.constant 0.000000e+00 : f32
    %7 = vector.broadcast %cst_5 : f32 to vector<32x32xf32>
    %8 = arith.maximumf %6, %7 : vector<32x32xf32>
    %9 = arith.truncf %8 : vector<32x32xf32> to vector<32x32xbf16>
    %c0_6 = arith.constant 0 : index
    %c0_7 = arith.constant 0 : index
    %10 = vector.load %arg4[%c0_6, %c0_7] : memref<32x16xbf16, #tpu.memory_space<vmem>>, vector<32x16xbf16>
    %cst_8 = arith.constant dense<0.000000e+00> : vector<32x16xf32>
    %11 = tpu.matmul %9, %10, %cst_8 {dimension_numbers = #tpu.dot_dimension_numbers<[1], [0], [0], [1], [0, 0, 1, 1], [], []>} : vector<32x32xbf16>, vector<32x16xbf16>, vector<32x16xf32> -> vector<32x16xf32>
    %c0_9 = arith.constant 0 : index
    %c0_10 = arith.constant 0 : index
    %12 = vector.load %arg5[%c0_9, %c0_10] : memref<1x16xf32, #tpu.memory_space<vmem>>, vector<1x16xf32>
    %13 = vector.broadcast %12 : vector<1x16xf32> to vector<32x16xf32>
    %14 = arith.addf %11, %13 : vector<32x16xf32>
    %cst_11 = arith.constant 0.000000e+00 : f32
    %15 = vector.broadcast %cst_11 : f32 to vector<32x16xf32>
    %16 = arith.maximumf %14, %15 : vector<32x16xf32>
    %17 = arith.truncf %16 : vector<32x16xf32> to vector<32x16xbf16>
    %c0_12 = arith.constant 0 : index
    %c0_13 = arith.constant 0 : index
    %18 = vector.load %arg6[%c0_12, %c0_13] : memref<16x128xbf16, #tpu.memory_space<vmem>>, vector<16x128xbf16>
    %cst_14 = arith.constant dense<0.000000e+00> : vector<32x128xf32>
    %19 = tpu.matmul %17, %18, %cst_14 {dimension_numbers = #tpu.dot_dimension_numbers<[1], [0], [0], [1], [0, 0, 1, 1], [], []>} : vector<32x16xbf16>, vector<16x128xbf16>, vector<32x128xf32> -> vector<32x128xf32>
    %c0_15 = arith.constant 0 : index
    %c0_16 = arith.constant 0 : index
    %20 = vector.load %arg7[%c0_15, %c0_16] : memref<1x128xf32, #tpu.memory_space<vmem>>, vector<1x128xf32>
    %21 = vector.broadcast %20 : vector<1x128xf32> to vector<32x128xf32>
    %22 = arith.addf %19, %21 : vector<32x128xf32>
    %cst_17 = arith.constant dense<0xFF800000> : vector<32xf32>
    %23 = vector.multi_reduction <maximumf>, %22, %cst_17 [1] : vector<32x128xf32> to vector<32xf32>
    %24 = vector.shape_cast %23 : vector<32xf32> to vector<32x1xf32>
    %25 = vector.broadcast %24 : vector<32x1xf32> to vector<32x128xf32>
    %26 = arith.subf %22, %25 : vector<32x128xf32>
    %27 = math.exp %26 : vector<32x128xf32>
    %cst_18 = arith.constant dense<0.000000e+00> : vector<32xf32>
    %28 = vector.multi_reduction <add>, %27, %cst_18 [1] : vector<32x128xf32> to vector<32xf32>
    %29 = vector.shape_cast %28 : vector<32xf32> to vector<32x1xf32>
    %30 = math.log %29 : vector<32x1xf32>
    %31 = vector.broadcast %30 : vector<32x1xf32> to vector<32x128xf32>
    %32 = arith.subf %26, %31 : vector<32x128xf32>
    %c0_19 = arith.constant 0 : index
    %c0_20 = arith.constant 0 : index
    %33 = vector.load %arg8[%c0_19, %c0_20] : memref<32x128xf32, #tpu.memory_space<vmem>>, vector<32x128xf32>
    tpu.vector_store %arg8[%c0_19, %c0_20], %32 {strides = array<i32>} : memref<32x128xf32, #tpu.memory_space<vmem>>, vector<32x128xf32>,
    return
  }
  func.func @transform_0(%arg0: i32) -> (i32, i32) {
    %c0_i32 = arith.constant 0 : i32
    %c0_i32_0 = arith.constant 0 : i32
    return %arg0, %c0_i32 : i32, i32
  }
  func.func @transform_1(%arg0: i32) -> (i32, i32) {
    %c0_i32 = arith.constant 0 : i32
    %c0_i32_0 = arith.constant 0 : i32
    %c0_i32_1 = arith.constant 0 : i32
    return %c0_i32, %c0_i32_0 : i32, i32
  }
  func.func @transform_2(%arg0: i32) -> (i32, i32) {
    %c0_i32 = arith.constant 0 : i32
    %c0_i32_0 = arith.constant 0 : i32
    %c0_i32_1 = arith.constant 0 : i32
    return %c0_i32, %c0_i32_0 : i32, i32
  }
  func.func @transform_3(%arg0: i32) -> (i32, i32) {
    %c0_i32 = arith.constant 0 : i32
    %c0_i32_0 = arith.constant 0 : i32
    %c0_i32_1 = arith.constant 0 : i32
    return %c0_i32, %c0_i32_0 : i32, i32
  }
  func.func @transform_4(%arg0: i32) -> (i32, i32) {
    %c0_i32 = arith.constant 0 : i32
    %c0_i32_0 = arith.constant 0 : i32
    %c0_i32_1 = arith.constant 0 : i32
    return %c0_i32, %c0_i32_0 : i32, i32
  }
  func.func @transform_5(%arg0: i32) -> (i32, i32) {
    %c0_i32 = arith.constant 0 : i32
    %c0_i32_0 = arith.constant 0 : i32
    %c0_i32_1 = arith.constant 0 : i32
    return %c0_i32, %c0_i32_0 : i32, i32
  }
  func.func @transform_6(%arg0: i32) -> (i32, i32) {
    %c0_i32 = arith.constant 0 : i32
    %c0_i32_0 = arith.constant 0 : i32
    %c0_i32_1 = arith.constant 0 : i32
    return %c0_i32, %c0_i32_0 : i32, i32
  }
  func.func @transform_7(%arg0: i32) -> (i32, i32) {
    %c0_i32 = arith.constant 0 : i32
    %c0_i32_0 = arith.constant 0 : i32
    return %arg0, %c0_i32 : i32, i32
  }
}

</mosaic_0001>

<llo_original>
// kernel: linear_classifier_forward.1
$region0: #{linear_classifier_forward.1}
  #allocation0 [shape = 'u32[]', space=smem, size = 0x4, offset = 0x4, fixed_abs, tag = 'smem constant byte address 0x4 - core index']
  #allocation1 [shape = 'u32[144,128]{1,0:T(1,128)}', space=vmem, size = 0x12000, scoped, tag = 'internal scratch']
  %s0 = inlined_call_operand.vmem [shape: f32[40,32], index: 0, kind: input, shape index: {}]
  %s1 = inlined_call_operand.vmem [shape: bf16[32,32], index: 1, kind: input, shape index: {}]
  %s2 = inlined_call_operand.vmem [shape: f32[1,32], index: 2, kind: input, shape index: {}]
  %s3 = inlined_call_operand.vmem [shape: bf16[32,16], index: 3, kind: input, shape index: {}]
  %s4 = inlined_call_operand.vmem [shape: f32[1,16], index: 4, kind: input, shape index: {}]
  %s5 = inlined_call_operand.vmem [shape: bf16[16,128], index: 5, kind: input, shape index: {}]
  %s6 = inlined_call_operand.vmem [shape: f32[1,128], index: 6, kind: input, shape index: {}]
  %s7 = inlined_call_operand.vmem [shape: f32[40,128], index: 7, kind: output, shape index: {}]
  %s8 = sld [smem:[#allocation0]]
  $region109: #{linear_classifier_forward.1} parent=0
    _
  %s10 = ssub.s32 1, %s8
  %s11 = scalar_select 0, %s10, %s8
  $region1: #{linear_classifier_forward.1} parent=0
    #allocation2 [shape = 'u8[32768]{0}', space=vmem, size = 0x8000, scoped, tag = 'output window, operand 0']
    loop: start=0, step=1, limit=4
    $region2: #{linear_classifier_forward.1} parent=1 // loop_pre_header
      _
    $region3: #{linear_classifier_forward.1} parent=1 // loop_header
      %s13 = sphi 0, %s17
      %p14 = scmp.ge.s32.totalorder %s13, 4
      %s23 = sphi 0, %s25
      %s26 = sphi 0, %s23
      %s27 = sphi 0, %s26
      %s43 = sphi 0, %s27
      %s47 = sphi 0, %s47
      %s49 = sphi 0, %s47
      %s50 = sphi 0, %s49
      %s64 = sphi 0, %s50
      %s68 = sphi 0, %s68
      %s70 = sphi 0, %s68
      %s71 = sphi 0, %s70
      %s85 = sphi 0, %s71
      %s89 = sphi 0, %s89
      %s91 = sphi 0, %s89
      %s92 = sphi 0, %s91
      %s106 = sphi 0, %s92
      %s110 = sphi 0, %s110
      %s112 = sphi 0, %s110
      %s113 = sphi 0, %s112
      %s127 = sphi 0, %s113
      %s131 = sphi 0, %s131
      %s133 = sphi 0, %s131
      %s134 = sphi 0, %s133
      %s148 = sphi 0, %s134
      %s152 = sphi 0, %s152
      %s154 = sphi 0, %s152
      %s155 = sphi 0, %s154
      %s169 = sphi 0, %s155
      %s175 = sphi 0, %s177
      %s178 = sphi 0, %s175
      %s179 = sphi 0, %s178
      %s195 = sphi 0, %s179
    $region4: #{linear_classifier_forward.1} parent=1 // loop_header_branch
      %16 = sbr.rel (%p14) target = $region8
    $region5: #{linear_classifier_forward.1} parent=1 // loop_body
      %s18 = ssub.s32 %s13, 1
      %s19 = ssub.s32 %s13, 2
      %s20 = sadd.s32 %s13, 1
      %s21 = ssub.s32 %s13, %s20
      %p22 = scmp.eq.s32.totalorder %s21, 0
      %s24 = sadd.s32 %s23, 1
      %s25 = scalar_select %p22, %s23, %s24
      %p28 = pneg %p22
      %p29 = scmp.eq.s32.totalorder %s13, 1
      %p30 = por %p28, %p29
      %p31 = scmp.ne.s32.totalorder %s23, %s26
      %p32 = scmp.eq.s32.totalorder %s13, 0
      %p33 = por %p31, %p32
      %p34 = scmp.ne.s32.totalorder %s23, %s26
      %p35 = scmp.eq.s32.totalorder %s18, 1
      %p36 = por %p34, %p35
      %p37 = scmp.ne.s32.totalorder %s26, %s27
      %p38 = scmp.eq.s32.totalorder %s18, 0
      %p39 = por %p37, %p38
      %p40 = scmp.ne.s32.totalorder %s26, %s27
      %p41 = scmp.eq.s32.totalorder %s19, 1
      %p42 = por %p40, %p41
      %p44 = scmp.ne.s32.totalorder %s27, %s43
      %p45 = scmp.eq.s32.totalorder %s19, 0
      %p46 = por %p44, %p45
      %s48 = sadd.s32 %s47, 1
      %p51 = scmp.eq.s32.totalorder %s13, 1
      %p52 = scmp.ne.s32.totalorder %s47, %s49
      %p53 = scmp.eq.s32.totalorder %s13, 0
      %p54 = por %p52, %p53
      %p55 = scmp.ne.s32.totalorder %s47, %s49
      %p56 = scmp.eq.s32.totalorder %s18, 1
      %p57 = por %p55, %p56
      %p58 = scmp.ne.s32.totalorder %s49, %s50
      %p59 = scmp.eq.s32.totalorder %s18, 0
      %p60 = por %p58, %p59
      %p61 = scmp.ne.s32.totalorder %s49, %s50
      %p62 = scmp.eq.s32.totalorder %s19, 1
      %p63 = por %p61, %p62
      %p65 = scmp.ne.s32.totalorder %s50, %s64
      %p66 = scmp.eq.s32.totalorder %s19, 0
      %p67 = por %p65, %p66
      %s69 = sadd.s32 %s68, 1
      %p72 = scmp.eq.s32.totalorder %s13, 1
      %p73 = scmp.ne.s32.totalorder %s68, %s70
      %p74 = scmp.eq.s32.totalorder %s13, 0
      %p75 = por %p73, %p74
      %p76 = scmp.ne.s32.totalorder %s68, %s70
      %p77 = scmp.eq.s32.totalorder %s18, 1
      %p78 = por %p76, %p77
      %p79 = scmp.ne.s32.totalorder %s70, %s71
      %p80 = scmp.eq.s32.totalorder %s18, 0
      %p81 = por %p79, %p80
      %p82 = scmp.ne.s32.totalorder %s70, %s71
      %p83 = scmp.eq.s32.totalorder %s19, 1
      %p84 = por %p82, %p83
      %p86 = scmp.ne.s32.totalorder %s71, %s85
      %p87 = scmp.eq.s32.totalorder %s19, 0
      %p88 = por %p86, %p87
      %s90 = sadd.s32 %s89, 1
      %p93 = scmp.eq.s32.totalorder %s13, 1
      %p94 = scmp.ne.s32.totalorder %s89, %s91
      %p95 = scmp.eq.s32.totalorder %s13, 0
      %p96 = por %p94, %p95
      %p97 = scmp.ne.s32.totalorder %s89, %s91
      %p98 = scmp.eq.s32.totalorder %s18, 1
      %p99 = por %p97, %p98
      %p100 = scmp.ne.s32.totalorder %s91, %s92
      %p101 = scmp.eq.s32.totalorder %s18, 0
      %p102 = por %p100, %p101
      %p103 = scmp.ne.s32.totalorder %s91, %s92
      %p104 = scmp.eq.s32.totalorder %s19, 1
      %p105 = por %p103, %p104
      %p107 = scmp.ne.s32.totalorder %s92, %s106
      %p108 = scmp.eq.s32.totalorder %s19, 0
      %p109 = por %p107, %p108
      %s111 = sadd.s32 %s110, 1
      %p114 = scmp.eq.s32.totalorder %s13, 1
      %p115 = scmp.ne.s32.totalorder %s110, %s112
      %p116 = scmp.eq.s32.totalorder %s13, 0
      %p117 = por %p115, %p116
      %p118 = scmp.ne.s32.totalorder %s110, %s112
      %p119 = scmp.eq.s32.totalorder %s18, 1
      %p120 = por %p118, %p119
      %p121 = scmp.ne.s32.totalorder %s112, %s113
      %p122 = scmp.eq.s32.totalorder %s18, 0
      %p123 = por %p121, %p122
      %p124 = scmp.ne.s32.totalorder %s112, %s113
      %p125 = scmp.eq.s32.totalorder %s19, 1
      %p126 = por %p124, %p125
      %p128 = scmp.ne.s32.totalorder %s113, %s127
      %p129 = scmp.eq.s32.totalorder %s19, 0
      %p130 = por %p128, %p129
      %s132 = sadd.s32 %s131, 1
      %p135 = scmp.eq.s32.totalorder %s13, 1
      %p136 = scmp.ne.s32.totalorder %s131, %s133
      %p137 = scmp.eq.s32.totalorder %s13, 0
      %p138 = por %p136, %p137
      %p139 = scmp.ne.s32.totalorder %s131, %s133
      %p140 = scmp.eq.s32.totalorder %s18, 1
      %p141 = por %p139, %p140
      %p142 = scmp.ne.s32.totalorder %s133, %s134
      %p143 = scmp.eq.s32.totalorder %s18, 0
      %p144 = por %p142, %p143
      %p145 = scmp.ne.s32.totalorder %s133, %s134
      %p146 = scmp.eq.s32.totalorder %s19, 1
      %p147 = por %p145, %p146
      %p149 = scmp.ne.s32.totalorder %s134, %s148
      %p150 = scmp.eq.s32.totalorder %s19, 0
      %p151 = por %p149, %p150
      %s153 = sadd.s32 %s152, 1
      %p156 = scmp.eq.s32.totalorder %s13, 1
      %p157 = scmp.ne.s32.totalorder %s152, %s154
      %p158 = scmp.eq.s32.totalorder %s13, 0
      %p159 = por %p157, %p158
      %p160 = scmp.ne.s32.totalorder %s152, %s154
      %p161 = scmp.eq.s32.totalorder %s18, 1
      %p162 = por %p160, %p161
      %p163 = scmp.ne.s32.totalorder %s154, %s155
      %p164 = scmp.eq.s32.totalorder %s18, 0
      %p165 = por %p163, %p164
      %p166 = scmp.ne.s32.totalorder %s154, %s155
      %p167 = scmp.eq.s32.totalorder %s19, 1
      %p168 = por %p166, %p167
      %p170 = scmp.ne.s32.totalorder %s155, %s169
      %p171 = scmp.eq.s32.totalorder %s19, 0
      %p172 = por %p170, %p171
      %s173 = ssub.s32 %s13, %s20
      %p174 = scmp.eq.s32.totalorder %s173, 0
      %s176 = sadd.s32 %s175, 1
      %s177 = scalar_select %p174, %s175, %s176
      %p180 = pneg %p174
      %p181 = scmp.eq.s32.totalorder %s13, 1
      %p182 = por %p180, %p181
      %p183 = scmp.ne.s32.totalorder %s175, %s178
      %p184 = scmp.eq.s32.totalorder %s13, 0
      %p185 = por %p183, %p184
      %p186 = scmp.ne.s32.totalorder %s175, %s178
      %p187 = scmp.eq.s32.totalorder %s18, 1
      %p188 = por %p186, %p187
      %p189 = scmp.ne.s32.totalorder %s178, %s179
      %p190 = scmp.eq.s32.totalorder %s18, 0
      %p191 = por %p189, %p190
      %p192 = scmp.ne.s32.totalorder %s178, %s179
      %p193 = scmp.eq.s32.totalorder %s19, 1
      %p194 = por %p192, %p193
      %p196 = scmp.ne.s32.totalorder %s179, %s195
      %p197 = scmp.eq.s32.totalorder %s19, 0
      %p198 = por %p196, %p197
      %p199 = scmp.le.s32.totalorder 1, %s13
      %p200 = scmp.lt.s32.totalorder %s13, 3
      %p201 = pnand %p199, %p200
      %p202 = pneg %p201
      // Predicated region
      $region9: #{linear_classifier_forward.1} parent=5 // pred_check
        _
      $region10: #{linear_classifier_forward.1} parent=5 // pred_check_branch
        %204 = sbr.rel (%p201) target = $region12
      $region11: #{linear_classifier_forward.1} parent=5 // pred_region
        %s205 = ssub.s32 %s13, 1
        // Predicated region
        $region13: #{linear_classifier_forward.1} parent=11 // pred_check
          %p206 = pneg %p60
        $region14: #{linear_classifier_forward.1} parent=11 // pred_check_branch
          %208 = sbr.rel (%p206) target = $region16
        $region15: #{linear_classifier_forward.1} parent=11 // pred_region
          _
        $region16: #{linear_classifier_forward.1} parent=11 // pred_fallthru
          _
        // Predicated region
        $region17: #{linear_classifier_forward.1} parent=11 // pred_check
          %p209 = pneg %p81
        $region18: #{linear_classifier_forward.1} parent=11 // pred_check_branch
          %211 = sbr.rel (%p209) target = $region20
        $region19: #{linear_classifier_forward.1} parent=11 // pred_region
          _
        $region20: #{linear_classifier_forward.1} parent=11 // pred_fallthru
          _
        // Predicated region
        $region21: #{linear_classifier_forward.1} parent=11 // pred_check
          %p212 = pneg %p102
        $region22: #{linear_classifier_forward.1} parent=11 // pred_check_branch
          %214 = sbr.rel (%p212) target = $region24
        $region23: #{linear_classifier_forward.1} parent=11 // pred_region
          _
        $region24: #{linear_classifier_forward.1} parent=11 // pred_fallthru
          _
        // Predicated region
        $region25: #{linear_classifier_forward.1} parent=11 // pred_check
          %p215 = pneg %p123
        $region26: #{linear_classifier_forward.1} parent=11 // pred_check_branch
          %217 = sbr.rel (%p215) target = $region28
        $region27: #{linear_classifier_forward.1} parent=11 // pred_region
          _
        $region28: #{linear_classifier_forward.1} parent=11 // pred_fallthru
          _
        // Predicated region
        $region29: #{linear_classifier_forward.1} parent=11 // pred_check
          %p218 = pneg %p144
        $region30: #{linear_classifier_forward.1} parent=11 // pred_check_branch
          %220 = sbr.rel (%p218) target = $region32
        $region31: #{linear_classifier_forward.1} parent=11 // pred_region
          _
        $region32: #{linear_classifier_forward.1} parent=11 // pred_fallthru
          _
        // Predicated region
        $region33: #{linear_classifier_forward.1} parent=11 // pred_check
          %p221 = pneg %p165
        $region34: #{linear_classifier_forward.1} parent=11 // pred_check_branch
          %223 = sbr.rel (%p221) target = $region36
        $region35: #{linear_classifier_forward.1} parent=11 // pred_region
          _
        $region36: #{linear_classifier_forward.1} parent=11 // pred_fallthru
          _
      $region12: #{linear_classifier_forward.1} parent=5 // pred_fallthru
        _
      %p224 = scmp.lt.s32.totalorder %s13, 2
      // Predicated region
      $region37: #{linear_classifier_forward.1} parent=5 // pred_check
        %p225 = pneg %p224
      $region38: #{linear_classifier_forward.1} parent=5 // pred_check_branch
        %227 = sbr.rel (%p225) target = $region40
      $region39: #{linear_classifier_forward.1} parent=5 // pred_region
        // Predicated region
        $region41: #{linear_classifier_forward.1} parent=39 // pred_check
          %p228 = pneg %p33
        $region42: #{linear_classifier_forward.1} parent=39 // pred_check_branch
          %230 = sbr.rel (%p228) target = $region44
        $region43: #{linear_classifier_forward.1} parent=39 // pred_region
          %s231 = smul.u32 4, %s13
          %s232 = ssub.s32 5, %s231
          %p233 = scmp.lt.s32.totalorder %s232, 4
          %s234 = scalar_select %p233, %s232, 4
          %s235 = smul.u32 128, %s234
          %p236 = scmp.lt.s32.totalorder %s231, 4
          %s237 = scalar_select %p236, %s231, 4
          %s238 = smul.addr %s237, 8
          %s239 = scalar_lea.vmem %s0, %s238
          %s240 = smul.u32 4, %s13
          %s241 = ssub.s32 5, %s240
          %p242 = scmp.lt.s32.totalorder %s241, 4
          %s243 = scalar_select %p242, %s241, 4
          %s244 = smul.u32 128, %s243
        $region44: #{linear_classifier_forward.1} parent=39 // pred_fallthru
          _
      $region40: #{linear_classifier_forward.1} parent=5 // pred_fallthru
        _
      %p245 = scmp.le.s32.totalorder 1, %s13
      %p246 = scmp.lt.s32.totalorder %s13, 3
      %p247 = pnand %p245, %p246
      %p248 = pneg %p247
      // Predicated region
      $region45: #{linear_classifier_forward.1} parent=5 // pred_check
        _
      $region46: #{linear_classifier_forward.1} parent=5 // pred_check_branch
        %250 = sbr.rel (%p247) target = $region48
      $region47: #{linear_classifier_forward.1} parent=5 // pred_region
        %s251 = ssub.s32 %s13, 1
        %s252 = smul.u32 4, %s18
        %s253 = ssub.s32 5, %s252
        %p254 = scmp.lt.s32.totalorder %s253, 4
        %s255 = scalar_select %p254, %s253, 4
        %s256 = smul.u32 128, %s255
        %p257 = scmp.lt.s32.totalorder %s252, 4
        %s258 = scalar_select %p257, %s252, 4
        %s259 = smul.addr %s258, 8
        %s260 = scalar_lea.vmem %s0, %s259
        %p261 = pneg %p39
        %p262 = pneg %p36
        %p263 = pneg %p60
        %p264 = pneg %p57
        %p265 = pneg %p81
        %p266 = pneg %p78
        %p267 = pneg %p102
        %p268 = pneg %p99
        %p269 = pneg %p123
        %p270 = pneg %p120
        %p271 = pneg %p144
        %p272 = pneg %p141
        %p273 = pneg %p165
        %p274 = pneg %p162
        %p275 = pneg %p191
        %p276 = pneg %p188
        %s277 = sand.u32 %s178, 1
        %s278 = sand.u32 %s178, 1
        %s279 = smul.addr %s278, 32
        %s280 = scalar_lea.vmem [#allocation2], %s279
        %s281 = smul.u32 4, %s18
        %s282 = ssub.s32 5, %s281
        %p283 = scmp.lt.s32.totalorder %s282, 4
        %s284 = scalar_select %p283, %s282, 4
        %s285 = smul.u32 128, %s284
        %p286 = scmp.lt.s32.totalorder %s281, 4
        %s287 = scalar_select %p286, %s281, 4
        %s288 = smul.addr %s287, 8
        %s289 = scalar_lea.vmem %s0, %s288
        %s290 = smul.u32 4, %s18
        %s291 = ssub.s32 5, %s290
        %p292 = scmp.lt.s32.totalorder %s291, 4
        %s293 = scalar_select %p292, %s291, 4
        %s294 = smul.u32 128, %s293
        %s295 = smul.u32 4, %s18
        %s296 = ssub.s32 5, %s295
        %p297 = scmp.lt.s32.totalorder %s296, 4
        %s298 = scalar_select %p297, %s296, 4
        %s299 = smul.u32 128, %s298
        %v301 = vld [vmem:[%s289] sm:$0xff]
        %v302 = vld [vmem:[%s289 + $0x8] sm:$0xff]
        %v303 = vld [vmem:[%s289 + $0x10] sm:$0xff]
        %v304 = vld [vmem:[%s289 + $0x18] sm:$0xff]
        %v305 = vpack.c.bf16 %v302, %v301
        %v306 = vpack.c.bf16 %v304, %v303
        %v307 = vld [vmem:[%s1] sm:$0xf]
        %v308 = vld [vmem:[%s1 + $0x4] sm:$0xf]
        %v309 = vld [vmem:[%s1 + $0x8] sm:$0xf]
        %v310 = vld [vmem:[%s1 + $0xc] sm:$0xf]
        %v311 = vld [vmem:[%s2] sm:$0x1]
        %v313 = vlaneseq
        %v314 = vshrl.u32 %v313, 7
        %v315 = vsub.s32 0, %v314
        %v316 = vrot.slane %v311, %v315
        %v322 = vunpack.c.l.b16 %v307
        %v323 = vunpack.c.l.b16 %v308
        %v324 = vunpack.c.l.b16 %v309
        %v325 = vunpack.c.l.b16 %v310
        %v326 = vpack.c.b16 %v323, %v322
        %v327 = vpack.c.b16 %v325, %v324
        %vm330 = vcmask 261120
        %v332 = vsel %vm330, %v305, 0
        %v335 = vsel %vm330, %v306, 0
        %337 = vmatprep.subr.bf16.mxu0 0
        %338 = vmatpush1.bf16.msra.mxu0 %v326
        %339 = vmatprep.subr.bf16.mxu0 0
        %340 = vmatpush1.bf16.msra.mxu0 %v327
        %341 = vmatprep.subr.bf16.mxu0 0
        %342 = vmatpush1.bf16.msra.mxu0 0
        %343 = vmatprep.subr.bf16.mxu0 0
        %344 = vmatpush1.bf16.msra.mxu0 0
        %345 = vmatprep.subr.bf16.mxu0 0
        %346 = vmatpush1.bf16.msra.mxu0 0
        %347 = vmatprep.subr.bf16.mxu0 0
        %348 = vmatpush1.bf16.msra.mxu0 0
        %349 = vmatprep.subr.bf16.mxu0 0
        %350 = vmatpush1.bf16.msra.mxu0 0
        %351 = vmatprep.subr.bf16.mxu0 0
        %352 = vmatpush1.bf16.msra.mxu0 0
        %353 = vmatprep.subr.bf16.mxu0 0
        %354 = vmatpush1.bf16.msra.mxu0 0
        %355 = vmatprep.subr.bf16.mxu0 0
        %356 = vmatpush1.bf16.msra.mxu0 0
        %357 = vmatprep.subr.bf16.mxu0 0
        %358 = vmatpush1.bf16.msra.mxu0 0
        %359 = vmatprep.subr.bf16.mxu0 0
        %360 = vmatpush1.bf16.msra.mxu0 0
        %361 = vmatprep.subr.bf16.mxu0 0
        %362 = vmatpush1.bf16.msra.mxu0 0
        %363 = vmatprep.subr.bf16.mxu0 0
        %364 = vmatpush1.bf16.msra.mxu0 0
        %365 = vmatprep.subr.bf16.mxu0 0
        %366 = vmatpush1.bf16.msra.mxu0 0
        %367 = vmatprep.subr.bf16.mxu0 0
        %368 = vmatpush1.bf16.msra.mxu0 0
        %369 = vmatprep.mubr.bf16.mxu0 0
        %370 = vmatmul.mubr.bf16.gmra.mrb[0].mxu0 %v332
        %v371 = vpop.f32.mrb[0].mxu0
        %v372 = vadd.f32 %v316, %v371
        %v373 = vpop.f32.mrb[0].mxu0
        %v374 = vpop.f32.mrb[0].mxu0
        %v375 = vadd.f32 %v316, %v374
        %v376 = vpop.f32.mrb[0].mxu0
        %377 = vmatprep.mubr.bf16.mxu0 0
        %378 = vmatmul.mubr.bf16.gmra.mrb[0].mxu0 %v335
        %v379 = vpop.f32.mrb[0].mxu0
        %v380 = vadd.f32 %v316, %v379
        %v381 = vpop.f32.mrb[0].mxu0
        %v382 = vpop.f32.mrb[0].mxu0
        %v383 = vadd.f32 %v316, %v382
        %v384 = vpop.f32.mrb[0].mxu0
        %385 = vdwg.mxu0
        %v386 = vmax.f32 %v372, 0.0
        %v387 = vmax.f32 %v375, 0.0
        %v388 = vmax.f32 %v380, 0.0
        %v389 = vmax.f32 %v383, 0.0
        %v390 = vpack.c.bf16 %v387, %v386
        %v391 = vpack.c.bf16 %v389, %v388
        %v392 = vld [vmem:[%s3] sm:$0xf]
        %v393 = vld [vmem:[%s3 + $0x4] sm:$0xf]
        %v394 = vld [vmem:[%s3 + $0x8] sm:$0xf]
        %v395 = vld [vmem:[%s3 + $0xc] sm:$0xf]
        %v396 = vld [vmem:[%s4] sm:$0x1]
        %v398 = vlaneseq
        %v399 = vshrl.u32 %v398, 7
        %v400 = vsub.s32 0, %v399
        %v401 = vrot.slane %v396, %v400
        %v407 = vunpack.c.l.b16 %v392
        %v408 = vunpack.c.l.b16 %v393
        %v409 = vunpack.c.l.b16 %v394
        %v410 = vunpack.c.l.b16 %v395
        %v411 = vpack.c.b16 %v408, %v407
        %v412 = vpack.c.b16 %v410, %v409
        %v416 = vsel %vm330, %v390, 0
        %v419 = vsel %vm330, %v391, 0
        %421 = vmatprep.subr.bf16.mxu0 0
        %422 = vmatpush1.bf16.msra.mxu0 %v411
        %423 = vmatprep.subr.bf16.mxu0 0
        %424 = vmatpush1.bf16.msra.mxu0 %v412
        %425 = vmatprep.subr.bf16.mxu0 0
        %426 = vmatpush1.bf16.msra.mxu0 0
        %427 = vmatprep.subr.bf16.mxu0 0
        %428 = vmatpush1.bf16.msra.mxu0 0
        %429 = vmatprep.subr.bf16.mxu0 0
        %430 = vmatpush1.bf16.msra.mxu0 0
        %431 = vmatprep.subr.bf16.mxu0 0
        %432 = vmatpush1.bf16.msra.mxu0 0
        %433 = vmatprep.subr.bf16.mxu0 0
        %434 = vmatpush1.bf16.msra.mxu0 0
        %435 = vmatprep.subr.bf16.mxu0 0
        %436 = vmatpush1.bf16.msra.mxu0 0
        %437 = vmatprep.subr.bf16.mxu0 0
        %438 = vmatpush1.bf16.msra.mxu0 0
        %439 = vmatprep.subr.bf16.mxu0 0
        %440 = vmatpush1.bf16.msra.mxu0 0
        %441 = vmatprep.subr.bf16.mxu0 0
        %442 = vmatpush1.bf16.msra.mxu0 0
        %443 = vmatprep.subr.bf16.mxu0 0
        %444 = vmatpush1.bf16.msra.mxu0 0
        %445 = vmatprep.subr.bf16.mxu0 0
        %446 = vmatpush1.bf16.msra.mxu0 0
        %447 = vmatprep.subr.bf16.mxu0 0
        %448 = vmatpush1.bf16.msra.mxu0 0
        %449 = vmatprep.subr.bf16.mxu0 0
        %450 = vmatpush1.bf16.msra.mxu0 0
        %451 = vmatprep.subr.bf16.mxu0 0
        %452 = vmatpush1.bf16.msra.mxu0 0
        %453 = vmatprep.mubr.bf16.mxu0 0
        %454 = vmatmul.mubr.bf16.gmra.mrb[0].mxu0 %v416
        %v455 = vpop.f32.mrb[0].mxu0
        %v456 = vadd.f32 %v401, %v455
        %v457 = vpop.f32.mrb[0].mxu0
        %v458 = vpop.f32.mrb[0].mxu0
        %v459 = vadd.f32 %v401, %v458
        %v460 = vpop.f32.mrb[0].mxu0
        %461 = vmatprep.mubr.bf16.mxu0 0
        %462 = vmatmul.mubr.bf16.gmra.mrb[0].mxu0 %v419
        %v463 = vpop.f32.mrb[0].mxu0
        %v464 = vadd.f32 %v401, %v463
        %v465 = vpop.f32.mrb[0].mxu0
        %v466 = vpop.f32.mrb[0].mxu0
        %v467 = vadd.f32 %v401, %v466
        %v468 = vpop.f32.mrb[0].mxu0
        %469 = vdwg.mxu0
        %v470 = vmax.f32 %v456, 0.0
        %v471 = vmax.f32 %v459, 0.0
        %v472 = vmax.f32 %v464, 0.0
        %v473 = vmax.f32 %v467, 0.0
        %v474 = vpack.c.bf16 %v471, %v470
        %v475 = vpack.c.bf16 %v473, %v472
        %v476 = vld [vmem:[%s5] sm:$0xf]
        %v477 = vld [vmem:[%s5 + $0x4] sm:$0xf]
        %v478 = vld [vmem:[%s6] sm:$0x1]
        %v480 = vlaneseq
        %v481 = vshrl.u32 %v480, 7
        %v482 = vsub.s32 0, %v481
        %v483 = vrot.slane %v478, %v482
        %v487 = vunpack.c.l.b16 %v476
        %v488 = vunpack.c.l.b16 %v477
        %v489 = vpack.c.b16 %v488, %v487
        %vm491 = vcmask 130048
        %v493 = vsel %vm491, %v474, 0
        %v496 = vsel %vm491, %v475, 0
        %498 = vmatprep.subr.bf16.mxu0 0
        %499 = vmatpush1.bf16.msra.mxu0 %v489
        %500 = vmatprep.subr.bf16.mxu0 0
        %501 = vmatpush1.bf16.msra.mxu0 0
        %502 = vmatprep.subr.bf16.mxu0 0
        %503 = vmatpush1.bf16.msra.mxu0 0
        %504 = vmatprep.subr.bf16.mxu0 0
        %505 = vmatpush1.bf16.msra.mxu0 0
        %506 = vmatprep.subr.bf16.mxu0 0
        %507 = vmatpush1.bf16.msra.mxu0 0
        %508 = vmatprep.subr.bf16.mxu0 0
        %509 = vmatpush1.bf16.msra.mxu0 0
        %510 = vmatprep.subr.bf16.mxu0 0
        %511 = vmatpush1.bf16.msra.mxu0 0
        %512 = vmatprep.subr.bf16.mxu0 0
        %513 = vmatpush1.bf16.msra.mxu0 0
        %514 = vmatprep.subr.bf16.mxu0 0
        %515 = vmatpush1.bf16.msra.mxu0 0
        %516 = vmatprep.subr.bf16.mxu0 0
        %517 = vmatpush1.bf16.msra.mxu0 0
        %518 = vmatprep.subr.bf16.mxu0 0
        %519 = vmatpush1.bf16.msra.mxu0 0
        %520 = vmatprep.subr.bf16.mxu0 0
        %521 = vmatpush1.bf16.msra.mxu0 0
        %522 = vmatprep.subr.bf16.mxu0 0
        %523 = vmatpush1.bf16.msra.mxu0 0
        %524 = vmatprep.subr.bf16.mxu0 0
        %525 = vmatpush1.bf16.msra.mxu0 0
        %526 = vmatprep.subr.bf16.mxu0 0
        %527 = vmatpush1.bf16.msra.mxu0 0
        %528 = vmatprep.subr.bf16.mxu0 0
        %529 = vmatpush1.bf16.msra.mxu0 0
        %530 = vmatprep.mubr.bf16.mxu0 0
        %531 = vmatmul.mubr.bf16.gmra.mrb[0].mxu0 %v493
        %v532 = vpop.f32.mrb[0].mxu0
        %v533 = vadd.f32 %v483, %v532
        %v534 = vpop.f32.mrb[0].mxu0
        %v535 = vpop.f32.mrb[0].mxu0
        %v536 = vadd.f32 %v483, %v535
        %v537 = vpop.f32.mrb[0].mxu0
        %538 = vmatprep.mubr.bf16.mxu0 0
        %539 = vmatmul.mubr.bf16.gmra.mrb[0].mxu0 %v496
        %v540 = vpop.f32.mrb[0].mxu0
        %v541 = vadd.f32 %v483, %v540
        %v542 = vpop.f32.mrb[0].mxu0
        %v543 = vpop.f32.mrb[0].mxu0
        %v544 = vadd.f32 %v483, %v543
        %v545 = vpop.f32.mrb[0].mxu0
        %546 = vdwg.mxu0
        %547 = vmax.xlane.f32.xlu0 %v533
        %v548 = vpop.xlane.xlu0 %547
        %549 = vmax.xlane.f32.xlu0 %v536
        %v550 = vpop.xlane.xlu0 %549
        %551 = vmax.xlane.f32.xlu0 %v541
        %v552 = vpop.xlane.xlu0 %551
        %553 = vmax.xlane.f32.xlu0 %v544
        %v554 = vpop.xlane.xlu0 %553
        %v555 = vsub.f32 %v533, %v548
        %v556 = vsub.f32 %v536, %v550
        %v557 = vsub.f32 %v541, %v552
        %v558 = vsub.f32 %v544, %v554
        %v559 = vmul.f32 %v555, 1.442695
        %v560 = vpow.pop %v559
        %v561 = vmul.f32 %v556, 1.442695
        %v562 = vpow.pop %v561
        %v563 = vmul.f32 %v557, 1.442695
        %v564 = vpow.pop %v563
        %v565 = vmul.f32 %v558, 1.442695
        %v566 = vpow.pop %v565
        %567 = vadd.xlane.f32.xlu0 %v560
        %v568 = vpop.xlane.xlu0 %567
        %569 = vadd.xlane.f32.xlu0 %v562
        %v570 = vpop.xlane.xlu0 %569
        %571 = vadd.xlane.f32.xlu0 %v564
        %v572 = vpop.xlane.xlu0 %571
        %573 = vadd.xlane.f32.xlu0 %v566
        %v574 = vpop.xlane.xlu0 %573
        %v575 = vlog2.pop %v568
        %v576 = vmul.f32 %v575, 0.6931472
        %v577 = vlog2.pop %v570
        %v578 = vmul.f32 %v577, 0.6931472
        %v579 = vlog2.pop %v572
        %v580 = vmul.f32 %v579, 0.6931472
        %v581 = vlog2.pop %v574
        %v582 = vmul.f32 %v581, 0.6931472
        %v583 = vsub.f32 %v555, %v576
        %v584 = vsub.f32 %v556, %v578
        %v585 = vsub.f32 %v557, %v580
        %v586 = vsub.f32 %v558, %v582
        %587 = vst [vmem:[%s280] sm:$0xff] %v583
        %588 = vst [vmem:[%s280 + $0x8] sm:$0xff] %v584
        %589 = vst [vmem:[%s280 + $0x10] sm:$0xff] %v585
        %590 = vst [vmem:[%s280 + $0x18] sm:$0xff] %v586
        %s591 = sand.u32 %s178, 1
        %s592 = sand.u32 %s178, 1
        %s593 = smul.addr %s592, 32
        %s594 = scalar_lea.vmem [#allocation2], %s593
        // Predicated region
        $region49: #{linear_classifier_forward.1} parent=47 // pred_check
          %p595 = pneg %p188
        $region50: #{linear_classifier_forward.1} parent=47 // pred_check_branch
          %597 = sbr.rel (%p595) target = $region52
        $region51: #{linear_classifier_forward.1} parent=47 // pred_region
          %s598 = smul.u32 4, %s18
          %s599 = ssub.s32 5, %s598
          %p600 = scmp.lt.s32.totalorder %s599, 4
          %s601 = scalar_select %p600, %s599, 4
          %s602 = smul.u32 128, %s601
          %p603 = scmp.ne.s32.totalorder 0, %s602
          %s604 = smul.addr %s598, 8
          %s605 = scalar_lea.vmem %s7, %s604
          // Predicated region
          $region53: #{linear_classifier_forward.1} parent=51 // pred_check
            %p606 = pneg %p603
          $region54: #{linear_classifier_forward.1} parent=51 // pred_check_branch
            %608 = sbr.rel (%p606) target = $region56
          $region55: #{linear_classifier_forward.1} parent=51 // pred_region
            // Predicated region
            $region57: #{linear_classifier_forward.1} parent=55 // pred_check
              _
            $region58: #{linear_classifier_forward.1} parent=55 // pred_check_branch
              %610 = sbr.rel (0) target = $region60
            $region59: #{linear_classifier_forward.1} parent=55 // pred_region
              // Predicated region
              $region79: #{linear_classifier_forward.1} parent=59 // pred_check
                _
              $region80: #{linear_classifier_forward.1} parent=59 // pred_check_branch
                %665 = sbr.rel (0) target = $region82
              $region81: #{linear_classifier_forward.1} parent=59 // pred_region
                %s666 = sshrl.u32 %s601, 2
                // While loop
                $region83: #{linear_classifier_forward.1} parent=81 // loop_pre_header
                  _
                $region84: #{linear_classifier_forward.1} parent=81 // loop_header
                  %s668 = sphi 0, %s670
                  %p669 = scmp.ge.s32.totalorder %s668, %s666
                  %s673 = sphi 0, %s686
                  %s674 = sphi %s594, %s689
                  %s675 = sphi %s605, %s690
                $region85: #{linear_classifier_forward.1} parent=81 // loop_header_branch
                  %672 = sbr.rel (%p669) target = $region89
                $region86: #{linear_classifier_forward.1} parent=81 // loop_body
                  %v676 = vld [vmem:[%s674] sm:$0xff]
                  %677 = vst [vmem:[%s675] sm:$0xff] %v676
                  %v678 = vld [vmem:[%s674 + $0x8] sm:$0xff]
                  %679 = vst [vmem:[%s675 + $0x8] sm:$0xff] %v678
                  %v680 = vld [vmem:[%s674 + $0x10] sm:$0xff]
                  %681 = vst [vmem:[%s675 + $0x10] sm:$0xff] %v680
                  %v682 = vld [vmem:[%s674 + $0x18] sm:$0xff]
                  %683 = vst [vmem:[%s675 + $0x18] sm:$0xff] %v682
                  %s684 = sadd.s32 1, %s673
                  %p685 = scmp.ge.s32.totalorder %s684, %s666
                  %s686 = scalar_select %p685, 0, %s684
                  %s687 = smul.u32 %s686, 32
                  %s688 = smul.u32 %s686, 32
                  %s689 = scalar_lea.vmem %s594, %s687 [#allocation2]
                  %s690 = scalar_lea.vmem %s605, %s688
                $region87: #{linear_classifier_forward.1} parent=81 // loop_footer
                  %s670 = sadd.s32 %s668, 1
                $region88: #{linear_classifier_forward.1} parent=81 // loop_footer_branch
                  %667 = sbr.rel target = $region84
                $region89: #{linear_classifier_forward.1} parent=81 // loop_exit
                  _
                %s691 = sshrl.u32 %s601, 2
                %s692 = sand.u32 %s601, 3
                %s693 = smul.u32 %s691, 4
                %s694 = smul.u32 8, %s693
                %s695 = scalar_lea.vmem %s594, %s694 [#allocation2]
                %s696 = smul.u32 8, %s693
                %s697 = scalar_lea.vmem %s605, %s696
                // While loop
                $region90: #{linear_classifier_forward.1} parent=81 // loop_pre_header
                  _
                $region91: #{linear_classifier_forward.1} parent=81 // loop_header
                  %s699 = sphi 0, %s701
                  %p700 = scmp.ge.s32.totalorder %s699, %s692
                  %s704 = sphi 0, %s711
                  %s705 = sphi %s695, %s714
                  %s706 = sphi %s697, %s715
                $region92: #{linear_classifier_forward.1} parent=81 // loop_header_branch
                  %703 = sbr.rel (%p700) target = $region96
                $region93: #{linear_classifier_forward.1} parent=81 // loop_body
                  %v707 = vld [vmem:[%s705] sm:$0xff]
                  %708 = vst [vmem:[%s706] sm:$0xff] %v707
                  %s709 = sadd.s32 1, %s704
                  %p710 = scmp.ge.s32.totalorder %s709, %s692
                  %s711 = scalar_select %p710, 0, %s709
                  %s712 = smul.u32 %s711, 8
                  %s713 = smul.u32 %s711, 8
                  %s714 = scalar_lea.vmem %s695, %s712 [#allocation2]
                  %s715 = scalar_lea.vmem %s697, %s713
                $region94: #{linear_classifier_forward.1} parent=81 // loop_footer
                  %s701 = sadd.s32 %s699, 1
                $region95: #{linear_classifier_forward.1} parent=81 // loop_footer_branch
                  %698 = sbr.rel target = $region91
                $region96: #{linear_classifier_forward.1} parent=81 // loop_exit
                  _
              $region82: #{linear_classifier_forward.1} parent=59 // pred_fallthru
                _
              // Predicated region
              $region97: #{linear_classifier_forward.1} parent=59 // pred_check
                _
              $region98: #{linear_classifier_forward.1} parent=59 // pred_check_branch
                %717 = sbr.rel target = $region100
              $region99: #{linear_classifier_forward.1} parent=59 // pred_region
                _
              $region100: #{linear_classifier_forward.1} parent=59 // pred_fallthru
                _
            $region60: #{linear_classifier_forward.1} parent=55 // pred_fallthru
              _
            // Predicated region
            $region61: #{linear_classifier_forward.1} parent=55 // pred_check
              _
            $region62: #{linear_classifier_forward.1} parent=55 // pred_check_branch
              %612 = sbr.rel target = $region64
            $region63: #{linear_classifier_forward.1} parent=55 // pred_region
              %s614 = sshrl.u32 %s601, 2
              // While loop
              $region65: #{linear_classifier_forward.1} parent=63 // loop_pre_header
                _
              $region66: #{linear_classifier_forward.1} parent=63 // loop_header
                %s616 = sphi 0, %s618
                %p617 = scmp.ge.s32.totalorder %s616, %s614
                %s621 = sphi 0, %s634
                %s622 = sphi %s594, %s637
                %s623 = sphi %s605, %s638
              $region67: #{linear_classifier_forward.1} parent=63 // loop_header_branch
                %620 = sbr.rel (%p617) target = $region71
              $region68: #{linear_classifier_forward.1} parent=63 // loop_body
                %v624 = vld [vmem:[%s622] sm:$0xff]
                %625 = vst [vmem:[%s623] sm:$0xff] %v624
                %v626 = vld [vmem:[%s622 + $0x8] sm:$0xff]
                %627 = vst [vmem:[%s623 + $0x8] sm:$0xff] %v626
                %v628 = vld [vmem:[%s622 + $0x10] sm:$0xff]
                %629 = vst [vmem:[%s623 + $0x10] sm:$0xff] %v628
                %v630 = vld [vmem:[%s622 + $0x18] sm:$0xff]
                %631 = vst [vmem:[%s623 + $0x18] sm:$0xff] %v630
                %s632 = sadd.s32 1, %s621
                %p633 = scmp.ge.s32.totalorder %s632, %s614
                %s634 = scalar_select %p633, 0, %s632
                %s635 = smul.u32 %s634, 32
                %s636 = smul.u32 %s634, 32
                %s637 = scalar_lea.vmem %s594, %s635 [#allocation2]
                %s638 = scalar_lea.vmem %s605, %s636
              $region69: #{linear_classifier_forward.1} parent=63 // loop_footer
                %s618 = sadd.s32 %s616, 1
              $region70: #{linear_classifier_forward.1} parent=63 // loop_footer_branch
                %615 = sbr.rel target = $region66
              $region71: #{linear_classifier_forward.1} parent=63 // loop_exit
                _
              %s639 = sshrl.u32 %s601, 2
              %s640 = sand.u32 %s601, 3
              %s641 = smul.u32 %s639, 4
              %s642 = smul.u32 8, %s641
              %s643 = scalar_lea.vmem %s594, %s642 [#allocation2]
              %s644 = smul.u32 8, %s641
              %s645 = scalar_lea.vmem %s605, %s644
              // While loop
              $region72: #{linear_classifier_forward.1} parent=63 // loop_pre_header
                _
              $region73: #{linear_classifier_forward.1} parent=63 // loop_header
                %s647 = sphi 0, %s649
                %p648 = scmp.ge.s32.totalorder %s647, %s640
                %s652 = sphi 0, %s659
                %s653 = sphi %s643, %s662
                %s654 = sphi %s645, %s663
              $region74: #{linear_classifier_forward.1} parent=63 // loop_header_branch
                %651 = sbr.rel (%p648) target = $region78
              $region75: #{linear_classifier_forward.1} parent=63 // loop_body
                %v655 = vld [vmem:[%s653] sm:$0xff]
                %656 = vst [vmem:[%s654] sm:$0xff] %v655
                %s657 = sadd.s32 1, %s652
                %p658 = scmp.ge.s32.totalorder %s657, %s640
                %s659 = scalar_select %p658, 0, %s657
                %s660 = smul.u32 %s659, 8
                %s661 = smul.u32 %s659, 8
                %s662 = scalar_lea.vmem %s643, %s660 [#allocation2]
                %s663 = scalar_lea.vmem %s645, %s661
              $region76: #{linear_classifier_forward.1} parent=63 // loop_footer
                %s649 = sadd.s32 %s647, 1
              $region77: #{linear_classifier_forward.1} parent=63 // loop_footer_branch
                %646 = sbr.rel target = $region73
              $region78: #{linear_classifier_forward.1} parent=63 // loop_exit
                _
            $region64: #{linear_classifier_forward.1} parent=55 // pred_fallthru
              _
          $region56: #{linear_classifier_forward.1} parent=51 // pred_fallthru
            _
          %718 = vnop
        $region52: #{linear_classifier_forward.1} parent=47 // pred_fallthru
          _
      $region48: #{linear_classifier_forward.1} parent=5 // pred_fallthru
        _
      %p719 = scmp.le.s32.totalorder 2, %s13
      // Predicated region
      $region101: #{linear_classifier_forward.1} parent=5 // pred_check
        %p720 = pneg %p719
      $region102: #{linear_classifier_forward.1} parent=5 // pred_check_branch
        %722 = sbr.rel (%p720) target = $region104
      $region103: #{linear_classifier_forward.1} parent=5 // pred_region
        %s723 = ssub.s32 %s13, 2
        // Predicated region
        $region105: #{linear_classifier_forward.1} parent=103 // pred_check
          %p724 = pneg %p194
        $region106: #{linear_classifier_forward.1} parent=103 // pred_check_branch
          %726 = sbr.rel (%p724) target = $region108
        $region107: #{linear_classifier_forward.1} parent=103 // pred_region
          %s727 = sand.u32 %s179, 1
          %s728 = sand.u32 %s179, 1
          %s729 = smul.addr %s728, 32
          %s730 = scalar_lea.vmem [#allocation2], %s729
        $region108: #{linear_classifier_forward.1} parent=103 // pred_fallthru
          _
      $region104: #{linear_classifier_forward.1} parent=5 // pred_fallthru
        _
    $region6: #{linear_classifier_forward.1} parent=1 // loop_footer
      %s17 = sadd.s32 1, %s13
    $region7: #{linear_classifier_forward.1} parent=1 // loop_footer_branch
      %12 = sbr.rel target = $region3
    $region8: #{linear_classifier_forward.1} parent=1 // loop_exit
      _

</llo_original>
